<compile_context>
chip_gen: v7x
topology: tpu7x:2x2x1
jax: 0.10.0
libtpu: 0.0.40
codegen_flags: <defaults>
</compile_context>

<pallas_src>
import functools

import jax
import jax.numpy as jnp
from jax.experimental import pallas as pl
from jax.experimental.pallas import tpu as pltpu


# ---------------------------------------------------------------------------
# VMEM / tiling heuristics
# ---------------------------------------------------------------------------

def _default_vmem_limit_bytes():
    """Scoped-VMEM budget: ~3/4 of physical VMEM, capped at 96 MiB."""
    cap = None
    try:
        cap = getattr(pltpu.get_tpu_info(), "vmem_capacity_bytes", None)
    except Exception:
        cap = None
    if not cap:
        cap = 64 * 1024 * 1024  # conservative (v7x-class) fallback
    return int(min(cap * 3 // 4, 96 * 1024 * 1024))


def _round_down(v, m):
    return (v // m) * m


def _pick_tile_rows(rows_fit, bc, align):
    """Largest row tile <= rows_fit, aligned to the dtype packing, <= bc."""
    tr = min(max(int(rows_fit), 1), bc)
    if tr < bc:
        tr = max(align, _round_down(tr, align))
        tr = min(tr, bc)
    # Prefer >= 2 row tiles so the grid can shard across both TensorCores (v7x);
    # neutral on single-TC generations.
    if tr == bc and bc >= 2 * align:
        tr = max(align, _round_down((bc + 1) // 2, align))
    return tr


# ---------------------------------------------------------------------------
# Kernels
# ---------------------------------------------------------------------------

def _adain_fused_kernel(x_ref, w_ref, b_ref, o_ref, *, eps, tile_rows, inv_hw):
    """Single-pass AdaIN on a (tile_rows, hw) block; w/b are VMEM-resident."""
    i = pl.program_id(0)
    start = pl.multiple_of(i * tile_rows, tile_rows)

    x = x_ref[...].astype(jnp.float32)                         # cast once
    s = jnp.sum(x, axis=1, keepdims=True)                      # (T, 1)
    ss = jnp.sum(x * x, axis=1, keepdims=True)                 # (T, 1)
    mean = s * inv_hw
    var = jnp.maximum(ss * inv_hw - mean * mean, 0.0)          # biased var, clamped

    w = w_ref[pl.ds(start, tile_rows), :].astype(jnp.float32)
    b = b_ref[pl.ds(start, tile_rows), :].astype(jnp.float32)
    scale = w * jax.lax.rsqrt(var + eps)                       # (T, 1)
    shift = b - mean * scale                                   # (T, 1)

    o_ref[...] = (x * scale + shift).astype(o_ref.dtype)       # 1 mul + 1 add / elem


def _adain_stats_kernel(x_ref, w_ref, b_ref, scale_ref, shift_ref,
                        sum_sc, sq_sc, *, eps, tile_rows, hw, chunk):
    """Accumulate per-row sum / sum-of-squares over spatial chunks; emit scale/shift."""
    i = pl.program_id(0)
    j = pl.program_id(1)
    nj = pl.num_programs(1)

    @pl.when(j == 0)
    def _():
        sum_sc[...] = jnp.zeros_like(sum_sc)
        sq_sc[...] = jnp.zeros_like(sq_sc)

    x = x_ref[...].astype(jnp.float32)
    # Mask columns past hw in the (possibly ragged) last spatial chunk.
    col = jax.lax.broadcasted_iota(jnp.int32, x.shape, 1)
    x = jnp.where(j * chunk + col < hw, x, 0.0)
    sum_sc[...] += jnp.sum(x, axis=1, keepdims=True)
    sq_sc[...] += jnp.sum(x * x, axis=1, keepdims=True)

    @pl.when(j == nj - 1)
    def _():
        inv_hw = 1.0 / hw
        mean = sum_sc[...] * inv_hw
        var = jnp.maximum(sq_sc[...] * inv_hw - mean * mean, 0.0)
        start = pl.multiple_of(i * tile_rows, tile_rows)
        w = w_ref[pl.ds(start, tile_rows), :].astype(jnp.float32)
        b = b_ref[pl.ds(start, tile_rows), :].astype(jnp.float32)
        scale = w * jax.lax.rsqrt(var + eps)
        scale_ref[...] = scale
        shift_ref[...] = b - mean * scale


def _adain_apply_kernel(x_ref, scale_ref, shift_ref, o_ref, *, tile_rows):
    """out = x * scale + shift with VMEM-resident per-row scale/shift."""
    i = pl.program_id(0)
    start = pl.multiple_of(i * tile_rows, tile_rows)
    scale = scale_ref[pl.ds(start, tile_rows), :]
    shift = shift_ref[pl.ds(start, tile_rows), :]
    x = x_ref[...].astype(jnp.float32)
    o_ref[...] = (x * scale + shift).astype(o_ref.dtype)


# ---------------------------------------------------------------------------
# Wrapper
# ---------------------------------------------------------------------------

def adaptive_instance_norm_2d(x, weight, bias, *, eps=1e-5,
                              spatial_chunk=None, vmem_limit_bytes=None):
    """AdaIN forward. x: (B, C, H, W); weight, bias: size B*C. Returns (B, C, H, W)."""
    b, c, h, w = x.shape
    bc, hw = b * c, h * w

    x2d = x.reshape(bc, hw)
    itemsize = jnp.dtype(x.dtype).itemsize
    sublane_align = 8 * max(1, 4 // itemsize)   # 8 (f32) / 16 (bf16) / 32 (int8/fp8)

    scoped = int(vmem_limit_bytes) if vmem_limit_bytes else _default_vmem_limit_bytes()
    block_budget = int(scoped * 0.8)            # headroom for semaphores / temporaries
    # Per-element cost with a full spatial row in one block:
    #   in + out blocks double-buffered (4 * itemsize) + f32 working copies (~8 B).
    bytes_per_elem = 4 * itemsize + 8
    rows_fit_full = block_budget // max(1, hw * bytes_per_elem)

    use_split = (spatial_chunk is not None) or (rows_fit_full < sublane_align)

    if not use_split:
        tile_rows = _pick_tile_rows(rows_fit_full, bc, sublane_align)
        chunk = hw
    else:
        if spatial_chunk is None:
            tile_rows = _pick_tile_rows(max(sublane_align, 256), bc, sublane_align)
            chunk = block_budget // max(1, tile_rows * bytes_per_elem)
        else:
            chunk = int(spatial_chunk)
            tile_rows = _pick_tile_rows(
                block_budget // max(1, chunk * bytes_per_elem), bc, sublane_align)
        chunk = hw if chunk >= hw else max(128, _round_down(chunk, 128))

    grid_rows = pl.cdiv(bc, tile_rows)
    bc_padded = grid_rows * tile_rows

    def _pad_rows(v):
        v = v.reshape(-1)
        if bc_padded > bc:
            v = jnp.pad(v, (0, bc_padded - bc))
        return v.reshape(bc_padded, 1)

    w2d = _pad_rows(weight)
    b2d = _pad_rows(bias)

    if not use_split:
        kernel = functools.partial(_adain_fused_kernel, eps=float(eps),
                                   tile_rows=tile_rows, inv_hw=1.0 / hw)
        out2d = pl.pallas_call(
            kernel,
            out_shape=jax.ShapeDtypeStruct((bc, hw), x.dtype),
            grid=(grid_rows,),
            in_specs=[
                pl.BlockSpec((tile_rows, hw), lambda i: (i, 0)),
                pl.BlockSpec((bc_padded, 1), lambda i: (0, 0)),   # VMEM-resident
                pl.BlockSpec((bc_padded, 1), lambda i: (0, 0)),   # VMEM-resident
            ],
            out_specs=pl.BlockSpec((tile_rows, hw), lambda i: (i, 0)),
            compiler_params=pltpu.CompilerParams(
                dimension_semantics=("parallel",),
                vmem_limit_bytes=scoped,
            ),
        )(x2d, w2d, b2d)
        return out2d.reshape(b, c, h, w)

    # ---- large-H*W path: stats (reduction over spatial chunks) + apply ----
    n_chunks = pl.cdiv(hw, chunk)

    stats_kernel = functools.partial(_adain_stats_kernel, eps=float(eps),
                                     tile_rows=tile_rows, hw=hw, chunk=chunk)
    scale2d, shift2d = pl.pallas_call(
        stats_kernel,
        out_shape=(jax.ShapeDtypeStruct((bc_padded, 1), jnp.float32),
                   jax.ShapeDtypeStruct((bc_padded, 1), jnp.float32)),
        grid=(grid_rows, n_chunks),
        in_specs=[
            pl.BlockSpec((tile_rows, chunk), lambda i, j: (i, j)),
            pl.BlockSpec((bc_padded, 1), lambda i, j: (0, 0)),    # VMEM-resident
            pl.BlockSpec((bc_padded, 1), lambda i, j: (0, 0)),    # VMEM-resident
        ],
        out_specs=(pl.BlockSpec((tile_rows, 1), lambda i, j: (i, 0)),
                   pl.BlockSpec((tile_rows, 1), lambda i, j: (i, 0))),
        scratch_shapes=[pltpu.VMEM((tile_rows, 1), jnp.float32),
                        pltpu.VMEM((tile_rows, 1), jnp.float32)],
        compiler_params=pltpu.CompilerParams(
            dimension_semantics=("parallel", "arbitrary"),
            vmem_limit_bytes=scoped,
        ),
    )(x2d, w2d, b2d)

    apply_kernel = functools.partial(_adain_apply_kernel, tile_rows=tile_rows)
    out2d = pl.pallas_call(
        apply_kernel,
        out_shape=jax.ShapeDtypeStruct((bc, hw), x.dtype),
        grid=(grid_rows, n_chunks),
        in_specs=[
            pl.BlockSpec((tile_rows, chunk), lambda i, j: (i, j)),
            pl.BlockSpec((bc_padded, 1), lambda i, j: (0, 0)),    # VMEM-resident
            pl.BlockSpec((bc_padded, 1), lambda i, j: (0, 0)),    # VMEM-resident
        ],
        out_specs=pl.BlockSpec((tile_rows, chunk), lambda i, j: (i, j)),
        compiler_params=pltpu.CompilerParams(
            dimension_semantics=("parallel", "parallel"),
            vmem_limit_bytes=scoped,
        ),
    )(x2d, scale2d, shift2d)
    return out2d.reshape(b, c, h, w)


def adaptive_instance_norm_2d_ref(x, weight, bias, *, eps=1e-5):
    """Pure-JAX reference mirroring F.batch_norm(training=True) on (1, B*C, H, W)."""
    b, c, h, w = x.shape
    x2d = x.reshape(b * c, h * w).astype(jnp.float32)
    mean = jnp.mean(x2d, axis=1, keepdims=True)
    var = jnp.mean((x2d - mean) ** 2, axis=1, keepdims=True)
    out = (x2d - mean) / jnp.sqrt(var + eps)
    out = out * weight.reshape(-1, 1) + bias.reshape(-1, 1)
    return out.reshape(b, c, h, w).astype(x.dtype)


if __name__ == "__main__":
    B, C, H, W = 2, 4, 16, 16
    key = jax.random.PRNGKey(0)
    kx, kw, kb, kx2 = jax.random.split(key, 4)

    x = jax.random.normal(kx, (B, C, H, W), dtype=jnp.float32)
    # weight / bias must be assigned before calling AdaIN; length B*C
    # (in CoMoMUNIT they come from an MLP). Deterministic init here.
    weight = 1.0 + 0.1 * jax.random.normal(kw, (B * C,), dtype=jnp.float32)
    bias = 0.1 * jax.random.normal(kb, (B * C,), dtype=jnp.float32)

    # Fused single-pass path.
    out = adaptive_instance_norm_2d(x, weight, bias, eps=1e-5)
    out = jax.block_until_ready(out)
    ref = adaptive_instance_norm_2d_ref(x, weight, bias, eps=1e-5)
    assert out.shape == (B, C, H, W)
    assert jnp.allclose(out, ref, atol=1e-4, rtol=1e-4), "fused path mismatch vs reference"

    # Spatial-split (stats + apply) path, with a ragged last chunk (hw=384, chunk=256).
    H2, W2 = 16, 24
    x2 = jax.random.normal(kx2, (B, C, H2, W2), dtype=jnp.float32)
    out2 = adaptive_instance_norm_2d(x2, weight, bias, eps=1e-5, spatial_chunk=256)
    out2 = jax.block_until_ready(out2)
    ref2 = adaptive_instance_norm_2d_ref(x2, weight, bias, eps=1e-5)
    assert out2.shape == (B, C, H2, W2)
    assert jnp.allclose(out2, ref2, atol=1e-4, rtol=1e-4), "split path mismatch vs reference"

    print("KERNEL_OK")
</pallas_src>

<mosaic_0001>
module attributes {stable_mosaic.version = 11 : i64} {
  func.func @_adain_fused_kernel(%arg0: i32, %arg1: memref<8x256xf32, #tpu.memory_space<vmem>>, %arg2: memref<8x1xf32, #tpu.memory_space<vmem>>, %arg3: memref<8x1xf32, #tpu.memory_space<vmem>>, %arg4: memref<8x256xf32, #tpu.memory_space<vmem>>) attributes {dimension_semantics = [#tpu.dimension_semantics<parallel>], iteration_bounds = array<i64: 1>, scalar_prefetch = 0 : i64, scratch_operands = 0 : i64, tpu.core_type = #tpu.core_type<tc>, window_params = [{transform_indices = @transform_0, window_bounds = array<i64: 8, 256>}, {pipeline_mode = #tpu.pipeline_mode<synchronous>, transform_indices = @transform_1, window_bounds = array<i64: 8, 1>}, {pipeline_mode = #tpu.pipeline_mode<synchronous>, transform_indices = @transform_2, window_bounds = array<i64: 8, 1>}, {transform_indices = @transform_3, window_bounds = array<i64: 8, 256>}]} {
    %c8_i32 = arith.constant 8 : i32
    %0 = arith.muli %arg0, %c8_i32 : i32
    %1 = tpu.assume_multiple %0, 8 : i32
    %c0 = arith.constant 0 : index
    %c0_0 = arith.constant 0 : index
    %2 = vector.load %arg1[%c0, %c0_0] : memref<8x256xf32, #tpu.memory_space<vmem>>, vector<8x256xf32>
    %cst = arith.constant dense<0.000000e+00> : vector<8xf32>
    %3 = vector.multi_reduction <add>, %2, %cst [1] : vector<8x256xf32> to vector<8xf32>
    %4 = vector.shape_cast %3 : vector<8xf32> to vector<8x1xf32>
    %5 = arith.mulf %2, %2 : vector<8x256xf32>
    %cst_1 = arith.constant dense<0.000000e+00> : vector<8xf32>
    %6 = vector.multi_reduction <add>, %5, %cst_1 [1] : vector<8x256xf32> to vector<8xf32>
    %7 = vector.shape_cast %6 : vector<8xf32> to vector<8x1xf32>
    %cst_2 = arith.constant 3.906250e-03 : f32
    %8 = vector.broadcast %cst_2 : f32 to vector<8x1xf32>
    %9 = arith.mulf %4, %8 : vector<8x1xf32>
    %cst_3 = arith.constant 3.906250e-03 : f32
    %10 = vector.broadcast %cst_3 : f32 to vector<8x1xf32>
    %11 = arith.mulf %7, %10 : vector<8x1xf32>
    %12 = arith.mulf %9, %9 : vector<8x1xf32>
    %13 = arith.subf %11, %12 : vector<8x1xf32>
    %cst_4 = arith.constant 0.000000e+00 : f32
    %14 = vector.broadcast %cst_4 : f32 to vector<8x1xf32>
    %15 = arith.maximumf %13, %14 : vector<8x1xf32>
    %16 = arith.index_cast %1 : i32 to index
    %c0_5 = arith.constant 0 : index
    %17 = vector.load %arg2[%16, %c0_5] : memref<8x1xf32, #tpu.memory_space<vmem>>, vector<8x1xf32>
    %18 = arith.index_cast %1 : i32 to index
    %c0_6 = arith.constant 0 : index
    %19 = vector.load %arg3[%18, %c0_6] : memref<8x1xf32, #tpu.memory_space<vmem>>, vector<8x1xf32>
    %cst_7 = arith.constant 9.99999974E-6 : f32
    %20 = vector.broadcast %cst_7 : f32 to vector<8x1xf32>
    %21 = arith.addf %15, %20 : vector<8x1xf32>
    %22 = math.rsqrt %21 : vector<8x1xf32>
    %23 = arith.mulf %17, %22 : vector<8x1xf32>
    %24 = arith.mulf %9, %23 : vector<8x1xf32>
    %25 = arith.subf %19, %24 : vector<8x1xf32>
    %26 = vector.broadcast %23 : vector<8x1xf32> to vector<8x256xf32>
    %27 = arith.mulf %2, %26 : vector<8x256xf32>
    %28 = vector.broadcast %25 : vector<8x1xf32> to vector<8x256xf32>
    %29 = arith.addf %27, %28 : vector<8x256xf32>
    %c0_8 = arith.constant 0 : index
    %c0_9 = arith.constant 0 : index
    %30 = vector.load %arg4[%c0_8, %c0_9] : memref<8x256xf32, #tpu.memory_space<vmem>>, vector<8x256xf32>
    tpu.vector_store %arg4[%c0_8, %c0_9], %29 {strides = array<i32>} : memref<8x256xf32, #tpu.memory_space<vmem>>, vector<8x256xf32>,
    return
  }
  func.func @transform_0(%arg0: i32) -> (i32, i32) {
    %c0_i32 = arith.constant 0 : i32
    %c0_i32_0 = arith.constant 0 : i32
    return %arg0, %c0_i32 : i32, i32
  }
  func.func @transform_1(%arg0: i32) -> (i32, i32) {
    %c0_i32 = arith.constant 0 : i32
    %c0_i32_0 = arith.constant 0 : i32
    %c0_i32_1 = arith.constant 0 : i32
    return %c0_i32, %c0_i32_0 : i32, i32
  }
  func.func @transform_2(%arg0: i32) -> (i32, i32) {
    %c0_i32 = arith.constant 0 : i32
    %c0_i32_0 = arith.constant 0 : i32
    %c0_i32_1 = arith.constant 0 : i32
    return %c0_i32, %c0_i32_0 : i32, i32
  }
  func.func @transform_3(%arg0: i32) -> (i32, i32) {
    %c0_i32 = arith.constant 0 : i32
    %c0_i32_0 = arith.constant 0 : i32
    return %arg0, %c0_i32 : i32, i32
  }
}

</mosaic_0001>

<llo_original>
// kernel: tpu_custom_call.1
$region0: #{tpu_custom_call.1}
  #allocation0 [shape = 'u32[]', space=smem, size = 0x4, offset = 0x4, fixed_abs, tag = 'smem constant byte address 0x4 - core index']
  #allocation1 [shape = 'u32[144,128]{1,0:T(1,128)}', space=vmem, size = 0x12000, scoped, tag = 'internal scratch']
  %s0 = inlined_call_operand.vmem [shape: f32[8,256], index: 0, kind: input, shape index: {}]
  %s1 = inlined_call_operand.vmem [shape: f32[8,1], index: 1, kind: input, shape index: {}]
  %s2 = inlined_call_operand.vmem [shape: f32[8,1], index: 2, kind: input, shape index: {}]
  %s3 = inlined_call_operand.hbm [shape: f32[8,256], index: 3, kind: output, shape index: {}]
  %s4 = sld [smem:[#allocation0]]
  $region22: #{tpu_custom_call.1} parent=0
    _
  %s6 = ssub.s32 1, %s4
  %s7 = scalar_select 0, %s6, %s4
  $region1: #{tpu_custom_call.1} parent=0
    #allocation2 [shape = 'u8[8192]{0}', space=vmem, size = 0x2000, scoped, tag = 'output window, operand 0, single buffered']
    #allocation3 [shape = 's32[1]{0}', space=sflag, size = 0x4, scoped, tag = 'scoped memory for tpu_custom_call.1']
    %8 = vsyncpa [#allocation3], 0
    // Predicated region
    $region2: #{tpu_custom_call.1} parent=1 // pred_check
      _
    $region3: #{tpu_custom_call.1} parent=1 // pred_check_branch
      %10 = sbr.rel (0) target = $region5
    $region4: #{tpu_custom_call.1} parent=1 // pred_region
      _
    $region5: #{tpu_custom_call.1} parent=1 // pred_fallthru
      _
    // Predicated region
    $region6: #{tpu_custom_call.1} parent=1 // pred_check
      _
    $region7: #{tpu_custom_call.1} parent=1 // pred_check_branch
      %12 = sbr.rel (0) target = $region9
    $region8: #{tpu_custom_call.1} parent=1 // pred_region
      _
    $region9: #{tpu_custom_call.1} parent=1 // pred_fallthru
      _
    // Predicated region
    $region10: #{tpu_custom_call.1} parent=1 // pred_check
      _
    $region11: #{tpu_custom_call.1} parent=1 // pred_check_branch
      %14 = sbr.rel (0) target = $region13
    $region12: #{tpu_custom_call.1} parent=1 // pred_region
      _
    $region13: #{tpu_custom_call.1} parent=1 // pred_fallthru
      _
    %s15 = smul.u32 0, 8
    %v16 = vld [vmem:[%s0] sm:$0xff]
    %v17 = vld [vmem:[%s0 + $0x8] sm:$0xff]
    %v18 = vadd.f32 %v16, %v17
    %19 = vadd.xlane.f32.xlu0 %v18
    %v20 = vpop.xlane.xlu0 %19
    %v21 = vmul.f32 %v16, %v16
    %v22 = vmul.f32 %v17, %v17
    %v23 = vadd.f32 %v21, %v22
    %24 = vadd.xlane.f32.xlu0 %v23
    %v25 = vpop.xlane.xlu0 %24
    %v26 = vmul.f32 %v20, 0.00390625
    %v27 = vmul.f32 %v25, 0.00390625
    %v28 = vmul.f32 %v26, %v26
    %v29 = vsub.f32 %v27, %v28
    %v30 = vmax.f32 %v29, 0.0
    %s31 = scalar_lea.vmem %s1, %s15
    %v32 = vld [vmem:[%s31] sm:$0xff]
    %s33 = scalar_lea.vmem %s2, %s15
    %v34 = vld [vmem:[%s33] sm:$0xff]
    %v35 = vadd.f32 %v30, 1e-05
    %v36 = vrsqrt.pop %v35
    %v37 = vmul.f32 %v32, %v36
    %v38 = vmul.f32 %v26, %v37
    %v39 = vsub.f32 %v34, %v38
    %41 = vset.pattern.permute.xlu0 0
    %42 = vperm.xlu0 %41, %v37
    %v43 = vpop.permute.xlu0 %42
    %v45 = vmul.f32 %v16, %v43
    %v46 = vmul.f32 %v17, %v43
    %48 = vset.pattern.permute.xlu0 0
    %49 = vperm.xlu0 %48, %v39
    %v50 = vpop.permute.xlu0 %49
    %v52 = vadd.f32 %v45, %v50
    %v53 = vadd.f32 %v46, %v50
    %54 = vst [vmem:[#allocation2] sm:$0xff] %v52
    %55 = vst [vmem:[#allocation2 + $0x8] sm:$0xff] %v53
    // Predicated region
    $region14: #{tpu_custom_call.1} parent=1 // pred_check
      _
    $region15: #{tpu_custom_call.1} parent=1 // pred_check_branch
      %57 = sbr.rel (0) target = $region17
    $region16: #{tpu_custom_call.1} parent=1 // pred_region
      %s59 = ssub.s32 256, 256
      %60 = vsyncadd [#allocation3], %s59
      %s62 = sshll.u32 [#allocation2], 4
      %s63 = int_to_ptr.vmem [resolvable:$true] %s62
      %65 = dma.vmem_to_hbm [thread:$0]  %s63, 256, %s3, [#allocation3]
    $region17: #{tpu_custom_call.1} parent=1 // pred_fallthru
      _
    // Predicated region
    $region18: #{tpu_custom_call.1} parent=1 // pred_check
      _
    $region19: #{tpu_custom_call.1} parent=1 // pred_check_branch
      %67 = sbr.rel (0) target = $region21
    $region20: #{tpu_custom_call.1} parent=1 // pred_region
      %68 = dma.done [#allocation3], 256
    $region21: #{tpu_custom_call.1} parent=1 // pred_fallthru
      _
    %69 = vsyncpa [#allocation3], 1

</llo_original>
